<compile_context>
chip_gen: v6e
topology: v6e:2x2x1
jax: 0.10.0
libtpu: 0.0.40
codegen_flags: <defaults>
</compile_context>

<pallas_src>
import math
import jax
import jax.numpy as jnp
from jax import lax
from jax.experimental import pallas as pl
from jax.experimental.pallas import tpu as pltpu

_TWO_OVER_PI = 2.0 / math.pi


def _round_up(x, m):
    return ((x + m - 1) // m) * m


# ----------------------------------------------------------------------------
# Pallas kernel 1: batched pairwise SQUARED Euclidean distance
# (torch.cdist equivalent for knn ranking; sqrt is unnecessary for top_k)
# ----------------------------------------------------------------------------
def _sqcdist_kernel(x_ref, yt_ref, out_ref):
    # x_ref: [1, tp, 3] (point-major), yt_ref: [1, 3, r_pad] (coord-major)
    # out_ref: [1, tp, r_pad]
    x = x_ref[0]                          # [tp, 3]
    yt = yt_ref[0]                        # [3, r_pad]
    dx = x[:, 0:1] - yt[0:1, :]           # [tp, r_pad] broadcast, VPU only
    dy = x[:, 1:2] - yt[1:2, :]
    dz = x[:, 2:3] - yt[2:3, :]
    out_ref[0] = dx * dx + dy * dy + dz * dz


def pallas_sqcdist(points, ref_points):
    """points: [b, p, 3], ref_points: [b, r, 3] -> [b, p, r] squared distances."""
    b, p, _ = points.shape
    r = ref_points.shape[1]
    tp = 128 if p >= 128 else _round_up(p, 8)
    p_pad = _round_up(p, tp)
    r_pad = _round_up(r, 128)

    x = points.astype(jnp.float32)
    if p_pad != p:
        x = jnp.pad(x, ((0, 0), (0, p_pad - p), (0, 0)))
    yt = jnp.transpose(ref_points, (0, 2, 1)).astype(jnp.float32)     # [b, 3, r]
    if r_pad != r:
        yt = jnp.pad(yt, ((0, 0), (0, 0), (0, r_pad - r)))

    out = pl.pallas_call(
        _sqcdist_kernel,
        out_shape=jax.ShapeDtypeStruct((b, p_pad, r_pad), jnp.float32),
        grid=(b, p_pad // tp),
        in_specs=[
            pl.BlockSpec((1, tp, 3), lambda i, j: (i, j, 0)),
            pl.BlockSpec((1, 3, r_pad), lambda i, j: (i, 0, 0)),
        ],
        out_specs=pl.BlockSpec((1, tp, r_pad), lambda i, j: (i, j, 0)),
        compiler_params=pltpu.CompilerParams(
            dimension_semantics=("parallel", "parallel")),
    )(x, yt)
    return out[:, :p, :r]    # padded rows/cols are garbage and sliced away


# ----------------------------------------------------------------------------
# Pallas kernel 2: fused calc_ppf_gpu over ALL knn levels, k-chunked
# ----------------------------------------------------------------------------
def _make_ppf_fused_kernel(k_sizes, n_tile, chunk=8):
    """k_sizes: per-level number of knn samples (static)."""
    offsets = []
    off = 0
    for k in k_sizes:
        offsets.append(off)
        off += k

    # atan(t)/ (pi/2) minimax poly on [0,1]: 2/pi folded into the coefficients.
    c1 = 0.9998660 * _TWO_OVER_PI
    c3 = -0.3302995 * _TWO_OVER_PI
    c5 = 0.1801410 * _TWO_OVER_PI
    c7 = -0.0851330 * _TWO_OVER_PI
    c9 = 0.0208351 * _TWO_OVER_PI
    tiny = 1e-24

    def _angle_over_pi(x2, y):
        """atan2(sqrt(x2), y) / pi for x2 >= 0 via the half-angle identity
        tan(theta/2) = (r - |y|) / sqrt(x2), r = sqrt(x2 + y^2).
        Only 2 EUP ops (sqrt + rsqrt); degenerate x2==0 handled by an explicit where."""
        r = jnp.sqrt(x2 + y * y)
        t = (r - jnp.abs(y)) * lax.rsqrt(jnp.maximum(x2, tiny))
        t = jnp.where(x2 > tiny, t, 0.0)        # angle is exactly 0 (y>=0) or pi (y<0)
        t2 = t * t
        u = t * (c1 + t2 * (c3 + t2 * (c5 + t2 * (c7 + t2 * c9))))
        return jnp.where(y >= 0.0, u, 1.0 - u)

    def kernel(p_ref, pn_ref, pa_ref, pan_ref, out_ref):
        # p_ref/pn_ref: [1, 3, n_tile]; pa_ref/pan_ref: [1, 3, K_total, n_tile]
        # out_ref: [1, 4L, n_tile]
        px, py_, pz = p_ref[0, 0:1, :], p_ref[0, 1:2, :], p_ref[0, 2:3, :]
        nx, ny, nz = pn_ref[0, 0:1, :], pn_ref[0, 1:2, :], pn_ref[0, 2:3, :]
        # Hoisted sublane broadcasts (JAX does not CSE broadcast_in_dim in loops).
        pxb = jnp.broadcast_to(px, (chunk, n_tile))
        pyb = jnp.broadcast_to(py_, (chunk, n_tile))
        pzb = jnp.broadcast_to(pz, (chunk, n_tile))
        nxb = jnp.broadcast_to(nx, (chunk, n_tile))
        nyb = jnp.broadcast_to(ny, (chunk, n_tile))
        nzb = jnp.broadcast_to(nz, (chunk, n_tile))

        def chunk_ppf(s, size):
            if size == chunk:
                bx, by, bz = pxb, pyb, pzb
                mx, my, mz = nxb, nyb, nzb
            else:   # rare remainder chunk: rely on implicit [1,n] broadcast
                bx, by, bz = px, py_, pz
                mx, my, mz = nx, ny, nz
            pax = pa_ref[0, 0, s:s + size, :]
            pay = pa_ref[0, 1, s:s + size, :]
            paz = pa_ref[0, 2, s:s + size, :]
            qx = pan_ref[0, 0, s:s + size, :]
            qy = pan_ref[0, 1, s:s + size, :]
            qz = pan_ref[0, 2, s:s + size, :]

            # vec_d = patches - points
            vdx = pax - bx
            vdy = pay - by
            vdz = paz - bz
            d = jnp.sqrt(vdx * vdx + vdy * vdy + vdz * vdz)

            # angle1: point normal vs vec_d
            y1 = mx * vdx + my * vdy + mz * vdz
            c1x = my * vdz - mz * vdy
            c1y = mz * vdx - mx * vdz
            c1z = mx * vdy - my * vdx
            a1 = _angle_over_pi(c1x * c1x + c1y * c1y + c1z * c1z, y1)

            # angle2: patch normal vs vec_d
            y2 = qx * vdx + qy * vdy + qz * vdz
            c2x = qy * vdz - qz * vdy
            c2y = qz * vdx - qx * vdz
            c2z = qx * vdy - qy * vdx
            a2 = _angle_over_pi(c2x * c2x + c2y * c2y + c2z * c2z, y2)

            # angle3: point normal vs patch normal
            y3 = mx * qx + my * qy + mz * qz
            c3x = my * qz - mz * qy
            c3y = mz * qx - mx * qz
            c3z = mx * qy - my * qx
            a3 = _angle_over_pi(c3x * c3x + c3y * c3y + c3z * c3z, y3)
            return d, a1, a2, a3

        for lvl, (o, k) in enumerate(zip(offsets, k_sizes)):
            acc = None   # [chunk, n_tile] vreg-resident running sums over full chunks
            rem = None   # [1, n_tile] running sums over the (single) partial chunk
            for c in range(0, k, chunk):
                size = min(chunk, k - c)
                vals = chunk_ppf(o + c, size)
                if size == chunk:
                    acc = list(vals) if acc is None else [a + v for a, v in zip(acc, vals)]
                else:
                    vs = [jnp.sum(v, axis=0, keepdims=True) for v in vals]
                    rem = vs if rem is None else [r_ + v for r_, v in zip(rem, vs)]
            inv_k = 1.0 / float(k)
            base = 4 * lvl
            for q in range(4):
                tot = None
                if acc is not None:
                    tot = jnp.sum(acc[q], axis=0, keepdims=True)
                if rem is not None:
                    tot = rem[q] if tot is None else tot + rem[q]
                out_ref[0, base + q:base + q + 1, :] = tot * inv_k

    return kernel


def pallas_calc_ppf_fused(points_t, normals_t, patches_t, patch_normals_t,
                          k_sizes, n_valid, n_tile=128):
    """Coord-major inputs: points_t/normals_t [b,3,n_pad]; patches_t/patch_normals_t
    [b,3,K_total,n_pad] (all knn levels concatenated). Returns [b, n_valid, 4*L]."""
    b, _, n_pad = points_t.shape
    K = patches_t.shape[2]
    L = len(k_sizes)
    assert sum(k_sizes) == K and n_pad % n_tile == 0

    out = pl.pallas_call(
        _make_ppf_fused_kernel(tuple(int(k) for k in k_sizes), n_tile),
        out_shape=jax.ShapeDtypeStruct((b, 4 * L, n_pad), jnp.float32),
        grid=(b, n_pad // n_tile),
        in_specs=[
            pl.BlockSpec((1, 3, n_tile), lambda i, j: (i, 0, j)),
            pl.BlockSpec((1, 3, n_tile), lambda i, j: (i, 0, j)),
            pl.BlockSpec((1, 3, K, n_tile), lambda i, j: (i, 0, 0, j)),
            pl.BlockSpec((1, 3, K, n_tile), lambda i, j: (i, 0, 0, j)),
        ],
        out_specs=pl.BlockSpec((1, 4 * L, n_tile), lambda i, j: (i, 0, j)),
        compiler_params=pltpu.CompilerParams(
            dimension_semantics=("parallel", "parallel")),
    )(points_t, normals_t, patches_t, patch_normals_t)

    out = out[:, :, :n_valid]                  # drop padded lanes
    return jnp.transpose(out, (0, 2, 1))       # [b, n, 4L]


# ----------------------------------------------------------------------------
# JAX glue mirroring the PyTorch helpers / Net methods
# ----------------------------------------------------------------------------
def hierachical_knn_query_list(points, ref_points, k_list):
    """Single top_k with k = max(k_list); per-level ranges are slices of it
    (identical results: top_k output is sorted, squared distance is order-preserving)."""
    sqdist = pallas_sqcdist(points, ref_points)             # Pallas hot path
    kmax = max(k_list)
    idx = jax.lax.top_k(-sqdist, kmax)[1]                   # [b, p, kmax]
    ret = [idx[:, :, :k_list[0]]]
    for i in range(1, len(k_list)):
        ret.append(idx[:, :, k_list[i - 1]:k_list[i]])
    return ret


class Net:
    """PPF feature path of VI_Net_geodino.Net, ported to JAX/Pallas.

    The DINOv2 extractor, open3d normal estimation, PointNet2MSG, Feat2Smap,
    SphericalFPN3, V_Branch and I_Branch are external modules whose source is
    not provided, so only the calc_ppf / knn hot path is implemented here.
    """

    def __init__(self, ppf_nn=(10, 20, 40, 80, 160, 300)):
        self.ppf_nn = list(ppf_nn)
        # deterministic parameter init (matches nn.Parameter(torch.tensor(-1.0)))
        self.match_threshould = jnp.array(-1.0, dtype=jnp.float32)

    def calc_ppf(self, pts, normal, n_tile=128):
        b, n, _ = pts.shape
        knn_index_list = hierachical_knn_query_list(pts, pts, self.ppf_nn)
        k_sizes = [int(idx.shape[-1]) for idx in knn_index_list]
        all_idx = jnp.concatenate(knn_index_list, axis=-1)            # [b, n, K]
        idx_t = jnp.transpose(all_idx, (0, 2, 1))                     # [b, K, n] (small int32)
        n_pad = _round_up(n, n_tile)
        if n_pad != n:
            idx_t = jnp.pad(idx_t, ((0, 0), (0, 0), (0, n_pad - n)))  # pad indices -> point 0

        pts_t = jnp.transpose(pts, (0, 2, 1)).astype(jnp.float32)     # [b, 3, n]  (tiny)
        nrm_t = jnp.transpose(normal, (0, 2, 1)).astype(jnp.float32)
        # Gather from the coord-major source -> patches produced directly in the kernel
        # layout [b, 3, K, n_pad]; no [b, n, K, 3] materialization / big transpose.
        gather = jax.vmap(lambda src, idx: src[:, idx])
        patches_t = gather(pts_t, idx_t)                              # [b, 3, K, n_pad]
        patch_normals_t = gather(nrm_t, idx_t)

        if n_pad != n:
            pts_t = jnp.pad(pts_t, ((0, 0), (0, 0), (0, n_pad - n)))
            nrm_t = jnp.pad(nrm_t, ((0, 0), (0, 0), (0, n_pad - n)))
        return pallas_calc_ppf_fused(pts_t, nrm_t, patches_t, patch_normals_t,
                                     k_sizes, n, n_tile)

    def forward(self, inputs):
        # TODO(synk): DINOv2 feature extraction, open3d normal estimation, PointNet2MSG,
        # Feat2Smap, SphericalFPN3, V_Branch and I_Branch have no available definitions;
        # only the PPF feature hot path (the provided dependent functions) is implemented.
        pts = inputs['pts']
        normals = inputs['normals']          # stands in for cal_normal() (open3d)
        ptsg = pts                            # original code takes pts[:, :300, :]
        ppf_feature = self.calc_ppf(ptsg, normals)
        return {'ppf_feature': ppf_feature}


# ----------------------------------------------------------------------------
# Pure-JAX references for the self-check
# ----------------------------------------------------------------------------
def _ref_sqcdist(x, y):
    return jnp.sum((x[:, :, None, :] - y[:, None, :, :]) ** 2, axis=-1)


def _ref_calc_ppf_gpu(points, point_normals, patches, patch_normals):
    pts = jnp.broadcast_to(points[:, :, None, :], patches.shape)
    nrm = jnp.broadcast_to(point_normals[:, :, None, :], patches.shape)
    vec_d = patches - pts
    d = jnp.sqrt(jnp.sum(vec_d ** 2, axis=-1, keepdims=True))

    def ang(a, b_):
        y = jnp.sum(a * b_, axis=-1, keepdims=True)
        x = jnp.sqrt(jnp.sum(jnp.cross(a, b_) ** 2, axis=-1, keepdims=True))
        return jnp.arctan2(x, y) / math.pi

    a1 = ang(nrm, vec_d)
    a2 = ang(patch_normals, vec_d)
    a3 = ang(nrm, patch_normals)
    ppf = jnp.concatenate([d, a1, a2, a3], axis=-1)
    return jnp.mean(ppf, axis=-2)                               # [b, n, 4]


def _ref_calc_ppf_levels(pts, normal, knn_index_list):
    gather = jax.vmap(lambda p, idx: p[idx])
    outs = []
    for idx in knn_index_list:
        patches = gather(pts, idx)
        patch_normals = gather(normal, idx)
        outs.append(_ref_calc_ppf_gpu(pts, normal, patches, patch_normals))
    return jnp.concatenate(outs, axis=-1)


if __name__ == "__main__":
    key = jax.random.PRNGKey(0)
    b, n = 2, 64                      # small stand-ins for (b, 300) points
    k_pts, k_nrm = jax.random.split(key)
    pts = jax.random.normal(k_pts, (b, n, 3), dtype=jnp.float32) * 0.1
    normals = jax.random.normal(k_nrm, (b, n, 3), dtype=jnp.float32)
    normals = normals / (jnp.linalg.norm(normals, axis=-1, keepdims=True) + 1e-8)

    net = Net(ppf_nn=(4, 8, 16))      # scaled-down version of [10,20,40,80,160,300]
    out = net.forward({'pts': pts, 'normals': normals})
    ppf = jax.block_until_ready(out['ppf_feature'])
    assert ppf.shape == (b, n, 4 * len(net.ppf_nn)), ppf.shape
    assert bool(jnp.all(jnp.isfinite(ppf)))

    # self-check 1: squared-cdist kernel vs pure-JAX reference
    sq_pal = jax.block_until_ready(pallas_sqcdist(pts, pts))
    sq_ref = _ref_sqcdist(pts, pts)
    assert float(jnp.max(jnp.abs(sq_pal - sq_ref))) < 1e-4

    # self-check 2: fused PPF kernel vs pure-JAX reference on the SAME knn indices
    knn_list = hierachical_knn_query_list(pts, pts, net.ppf_nn)
    ppf_ref = _ref_calc_ppf_levels(pts, normals, knn_list)
    err = float(jnp.max(jnp.abs(ppf - ppf_ref)))
    assert err < 2e-2, err            # minimax atan poly tolerance on normalized angles

    print("KERNEL_OK")
</pallas_src>

<mosaic_0001>
module attributes {stable_mosaic.version = 11 : i64} {
  func.func @_sqcdist_kernel(%arg0: i32, %arg1: i32, %arg2: memref<1x64x3xf32, #tpu.memory_space<vmem>>, %arg3: memref<1x3x128xf32, #tpu.memory_space<vmem>>, %arg4: memref<1x64x128xf32, #tpu.memory_space<vmem>>) attributes {dimension_semantics = [#tpu.dimension_semantics<parallel>, #tpu.dimension_semantics<parallel>], iteration_bounds = array<i64: 2, 1>, scalar_prefetch = 0 : i64, scratch_operands = 0 : i64, tpu.core_type = #tpu.core_type<tc>, window_params = [{transform_indices = @transform_0, window_bounds = array<i64: 1, 64, 3>}, {transform_indices = @transform_1, window_bounds = array<i64: 1, 3, 128>}, {transform_indices = @transform_2, window_bounds = array<i64: 1, 64, 128>}]} {
    %c0 = arith.constant 0 : index
    %c0_0 = arith.constant 0 : index
    %c0_1 = arith.constant 0 : index
    %0 = vector.load %arg2[%c0, %c0_0, %c0_1] : memref<1x64x3xf32, #tpu.memory_space<vmem>>, vector<1x64x3xf32>
    %1 = vector.shape_cast %0 : vector<1x64x3xf32> to vector<64x3xf32>
    %c0_2 = arith.constant 0 : index
    %c0_3 = arith.constant 0 : index
    %c0_4 = arith.constant 0 : index
    %2 = vector.load %arg3[%c0_2, %c0_3, %c0_4] : memref<1x3x128xf32, #tpu.memory_space<vmem>>, vector<1x3x128xf32>
    %3 = vector.shape_cast %2 : vector<1x3x128xf32> to vector<3x128xf32>
    %4 = vector.extract_strided_slice %1 {offsets = [0, 0], sizes = [64, 1], strides = [1, 1]} : vector<64x3xf32> to vector<64x1xf32>
    %5 = vector.extract_strided_slice %3 {offsets = [0, 0], sizes = [1, 128], strides = [1, 1]} : vector<3x128xf32> to vector<1x128xf32>
    %6 = vector.broadcast %4 : vector<64x1xf32> to vector<64x128xf32>
    %7 = vector.broadcast %5 : vector<1x128xf32> to vector<64x128xf32>
    %8 = arith.subf %6, %7 : vector<64x128xf32>
    %9 = vector.extract_strided_slice %1 {offsets = [0, 1], sizes = [64, 1], strides = [1, 1]} : vector<64x3xf32> to vector<64x1xf32>
    %10 = vector.extract_strided_slice %3 {offsets = [1, 0], sizes = [1, 128], strides = [1, 1]} : vector<3x128xf32> to vector<1x128xf32>
    %11 = vector.broadcast %9 : vector<64x1xf32> to vector<64x128xf32>
    %12 = vector.broadcast %10 : vector<1x128xf32> to vector<64x128xf32>
    %13 = arith.subf %11, %12 : vector<64x128xf32>
    %14 = vector.extract_strided_slice %1 {offsets = [0, 2], sizes = [64, 1], strides = [1, 1]} : vector<64x3xf32> to vector<64x1xf32>
    %15 = vector.extract_strided_slice %3 {offsets = [2, 0], sizes = [1, 128], strides = [1, 1]} : vector<3x128xf32> to vector<1x128xf32>
    %16 = vector.broadcast %14 : vector<64x1xf32> to vector<64x128xf32>
    %17 = vector.broadcast %15 : vector<1x128xf32> to vector<64x128xf32>
    %18 = arith.subf %16, %17 : vector<64x128xf32>
    %19 = arith.mulf %8, %8 : vector<64x128xf32>
    %20 = arith.mulf %13, %13 : vector<64x128xf32>
    %21 = arith.addf %19, %20 : vector<64x128xf32>
    %22 = arith.mulf %18, %18 : vector<64x128xf32>
    %23 = arith.addf %21, %22 : vector<64x128xf32>
    %c0_5 = arith.constant 0 : index
    %c0_6 = arith.constant 0 : index
    %c0_7 = arith.constant 0 : index
    %24 = vector.load %arg4[%c0_5, %c0_6, %c0_7] : memref<1x64x128xf32, #tpu.memory_space<vmem>>, vector<1x64x128xf32>
    %25 = vector.shape_cast %24 : vector<1x64x128xf32> to vector<64x128xf32>
    %26 = vector.shape_cast %23 : vector<64x128xf32> to vector<1x64x128xf32>
    tpu.vector_store %arg4[%c0_5, %c0_6, %c0_7], %26 {strides = array<i32>} : memref<1x64x128xf32, #tpu.memory_space<vmem>>, vector<1x64x128xf32>,
    return
  }
  func.func @transform_0(%arg0: i32, %arg1: i32) -> (i32, i32, i32) {
    %c0_i32 = arith.constant 0 : i32
    %c0_i32_0 = arith.constant 0 : i32
    return %arg0, %arg1, %c0_i32 : i32, i32, i32
  }
  func.func @transform_1(%arg0: i32, %arg1: i32) -> (i32, i32, i32) {
    %c0_i32 = arith.constant 0 : i32
    %c0_i32_0 = arith.constant 0 : i32
    %c0_i32_1 = arith.constant 0 : i32
    return %arg0, %c0_i32, %c0_i32_0 : i32, i32, i32
  }
  func.func @transform_2(%arg0: i32, %arg1: i32) -> (i32, i32, i32) {
    %c0_i32 = arith.constant 0 : i32
    %c0_i32_0 = arith.constant 0 : i32
    return %arg0, %arg1, %c0_i32 : i32, i32, i32
  }
}

</mosaic_0001>

<llo_original>
// kernel: tpu_custom_call.1
$region0: #{tpu_custom_call.1}
  #allocation0 [shape = 'u32[]', space=smem, size = 0x4, offset = 0x4, fixed_abs, tag = 'smem constant byte address 0x4 - core index']
  #allocation1 [shape = 'u32[144,128]{1,0:T(1,128)}', space=vmem, size = 0x12000, scoped, tag = 'internal scratch']
  %s0 = inlined_call_operand.vmem [shape: f32[2,64,3], index: 0, kind: input, shape index: {}]
  %s1 = inlined_call_operand.vmem [shape: f32[2,3,128], index: 1, kind: input, shape index: {}]
  %s2 = inlined_call_operand.hbm [shape: f32[2,64,128], index: 2, kind: output, shape index: {}]
  %s3 = sld [smem:[#allocation0]]
  $region41: #{tpu_custom_call.1} parent=0
    _
  %s5 = ssub.s32 1, %s3
  %s6 = scalar_select 0, %s5, %s3
  $region1: #{tpu_custom_call.1} parent=0
    #allocation2 [shape = 'u8[65536]{0}', space=vmem, size = 0x10000, scoped, tag = 'output window, operand 0']
    #allocation3 [shape = 's32[2]{0}', space=sflag, size = 0x8, scoped, tag = 'scoped memory for tpu_custom_call.1']
    %7 = vsyncpa [#allocation3], 0
    %s8 = scalar_lea.sflag [#allocation3], 1
    %9 = vsyncpa %s8, 0
    loop: start=0, step=1, limit=4
    $region2: #{tpu_custom_call.1} parent=1 // loop_pre_header
      _
    $region3: #{tpu_custom_call.1} parent=1 // loop_header
      %s11 = sphi 0, %s15
      %p12 = scmp.ge.s32.totalorder %s11, 4
      %s18 = sphi 0, %s30
      %s19 = sphi 0, %s26
      %s20 = sphi 0, %s18
      %s21 = sphi 0, %s19
      %s22 = sphi 0, %s20
      %s23 = sphi 0, %s21
      %s35 = sphi 0, %s37
      %s38 = sphi 0, %s35
      %s39 = sphi 0, %s38
      %s55 = sphi 0, %s39
      %s61 = sphi 0, %s63
      %s64 = sphi 0, %s61
      %s65 = sphi 0, %s64
      %s81 = sphi 0, %s65
      %s89 = sphi 0, %s91
      %s92 = sphi 0, %s89
      %s93 = sphi 0, %s92
      %s109 = sphi 0, %s93
    $region4: #{tpu_custom_call.1} parent=1 // loop_header_branch
      %14 = sbr.rel (%p12) target = $region8
    $region5: #{tpu_custom_call.1} parent=1 // loop_body
      %s16 = ssub.s32 %s11, 1
      %s17 = ssub.s32 %s11, 2
      %s24 = sadd.s32 1, %s19
      %p25 = scmp.ge.s32.totalorder %s24, 1
      %s26 = scalar_select %p25, 0, %s24
      %s27 = sadd.s32 1, %s18
      %s28 = scalar_select %p25, %s27, %s18
      %p29 = scmp.ge.s32.totalorder %s28, 2
      %s30 = scalar_select %p29, 0, %s28
      %s31 = ssub.s32 %s18, %s30
      %s32 = ssub.s32 %s19, %s26
      %s33 = sor.u32 %s31, %s32
      %p34 = scmp.eq.s32.totalorder %s33, 0
      %s36 = sadd.s32 %s35, 1
      %s37 = scalar_select %p34, %s35, %s36
      %p40 = pneg %p34
      %p41 = scmp.eq.s32.totalorder %s11, 1
      %p42 = por %p40, %p41
      %p43 = scmp.ne.s32.totalorder %s35, %s38
      %p44 = scmp.eq.s32.totalorder %s11, 0
      %p45 = por %p43, %p44
      %p46 = scmp.ne.s32.totalorder %s35, %s38
      %p47 = scmp.eq.s32.totalorder %s16, 1
      %p48 = por %p46, %p47
      %p49 = scmp.ne.s32.totalorder %s38, %s39
      %p50 = scmp.eq.s32.totalorder %s16, 0
      %p51 = por %p49, %p50
      %p52 = scmp.ne.s32.totalorder %s38, %s39
      %p53 = scmp.eq.s32.totalorder %s17, 1
      %p54 = por %p52, %p53
      %p56 = scmp.ne.s32.totalorder %s39, %s55
      %p57 = scmp.eq.s32.totalorder %s17, 0
      %p58 = por %p56, %p57
      %s59 = ssub.s32 %s18, %s30
      %p60 = scmp.eq.s32.totalorder %s59, 0
      %s62 = sadd.s32 %s61, 1
      %s63 = scalar_select %p60, %s61, %s62
      %p66 = pneg %p60
      %p67 = scmp.eq.s32.totalorder %s11, 1
      %p68 = por %p66, %p67
      %p69 = scmp.ne.s32.totalorder %s61, %s64
      %p70 = scmp.eq.s32.totalorder %s11, 0
      %p71 = por %p69, %p70
      %p72 = scmp.ne.s32.totalorder %s61, %s64
      %p73 = scmp.eq.s32.totalorder %s16, 1
      %p74 = por %p72, %p73
      %p75 = scmp.ne.s32.totalorder %s64, %s65
      %p76 = scmp.eq.s32.totalorder %s16, 0
      %p77 = por %p75, %p76
      %p78 = scmp.ne.s32.totalorder %s64, %s65
      %p79 = scmp.eq.s32.totalorder %s17, 1
      %p80 = por %p78, %p79
      %p82 = scmp.ne.s32.totalorder %s65, %s81
      %p83 = scmp.eq.s32.totalorder %s17, 0
      %p84 = por %p82, %p83
      %s85 = ssub.s32 %s18, %s30
      %s86 = ssub.s32 %s19, %s26
      %s87 = sor.u32 %s85, %s86
      %p88 = scmp.eq.s32.totalorder %s87, 0
      %s90 = sadd.s32 %s89, 1
      %s91 = scalar_select %p88, %s89, %s90
      %p94 = pneg %p88
      %p95 = scmp.eq.s32.totalorder %s11, 1
      %p96 = por %p94, %p95
      %p97 = scmp.ne.s32.totalorder %s89, %s92
      %p98 = scmp.eq.s32.totalorder %s11, 0
      %p99 = por %p97, %p98
      %p100 = scmp.ne.s32.totalorder %s89, %s92
      %p101 = scmp.eq.s32.totalorder %s16, 1
      %p102 = por %p100, %p101
      %p103 = scmp.ne.s32.totalorder %s92, %s93
      %p104 = scmp.eq.s32.totalorder %s16, 0
      %p105 = por %p103, %p104
      %p106 = scmp.ne.s32.totalorder %s92, %s93
      %p107 = scmp.eq.s32.totalorder %s17, 1
      %p108 = por %p106, %p107
      %p110 = scmp.ne.s32.totalorder %s93, %s109
      %p111 = scmp.eq.s32.totalorder %s17, 0
      %p112 = por %p110, %p111
      %p113 = scmp.le.s32.totalorder 1, %s11
      %p114 = scmp.lt.s32.totalorder %s11, 3
      %p115 = pnand %p113, %p114
      %p116 = pneg %p115
      // Predicated region
      $region9: #{tpu_custom_call.1} parent=5 // pred_check
        _
      $region10: #{tpu_custom_call.1} parent=5 // pred_check_branch
        %118 = sbr.rel (%p115) target = $region12
      $region11: #{tpu_custom_call.1} parent=5 // pred_region
        %s119 = ssub.s32 %s11, 1
      $region12: #{tpu_custom_call.1} parent=5 // pred_fallthru
        _
      %p120 = scmp.lt.s32.totalorder %s11, 2
      // Predicated region
      $region13: #{tpu_custom_call.1} parent=5 // pred_check
        %p121 = pneg %p120
      $region14: #{tpu_custom_call.1} parent=5 // pred_check_branch
        %123 = sbr.rel (%p121) target = $region16
      $region15: #{tpu_custom_call.1} parent=5 // pred_region
        // Predicated region
        $region17: #{tpu_custom_call.1} parent=15 // pred_check
          %p124 = pneg %p45
        $region18: #{tpu_custom_call.1} parent=15 // pred_check_branch
          %126 = sbr.rel (%p124) target = $region20
        $region19: #{tpu_custom_call.1} parent=15 // pred_region
          %s127 = smul.u32 8, %s19
          %p128 = scmp.lt.s32.totalorder %s18, 1
          %s129 = scalar_select %p128, %s18, 1
          %p130 = scmp.lt.s32.totalorder %s127, 7
          %s131 = scalar_select %p130, %s127, 7
          %s132 = smul.addr %s129, 8
          %s133 = sadd.s32 %s131, %s132
          %s134 = smul.addr %s133, 8
          %s135 = scalar_lea.vmem %s0, %s134
          %s136 = smul.u32 8, %s19
        $region20: #{tpu_custom_call.1} parent=15 // pred_fallthru
          _
        // Predicated region
        $region21: #{tpu_custom_call.1} parent=15 // pred_check
          %p137 = pneg %p71
        $region22: #{tpu_custom_call.1} parent=15 // pred_check_branch
          %139 = sbr.rel (%p137) target = $region24
        $region23: #{tpu_custom_call.1} parent=15 // pred_region
          %p140 = scmp.lt.s32.totalorder %s18, 1
          %s141 = scalar_select %p140, %s18, 1
          %s142 = smul.addr %s141, 4
          %s143 = scalar_lea.vmem %s1, %s142
        $region24: #{tpu_custom_call.1} parent=15 // pred_fallthru
          _
      $region16: #{tpu_custom_call.1} parent=5 // pred_fallthru
        _
      %p144 = scmp.le.s32.totalorder 1, %s11
      %p145 = scmp.lt.s32.totalorder %s11, 3
      %p146 = pnand %p144, %p145
      %p147 = pneg %p146
      // Predicated region
      $region25: #{tpu_custom_call.1} parent=5 // pred_check
        _
      $region26: #{tpu_custom_call.1} parent=5 // pred_check_branch
        %149 = sbr.rel (%p146) target = $region28
      $region27: #{tpu_custom_call.1} parent=5 // pred_region
        %s150 = ssub.s32 %s11, 1
        %s151 = smul.u32 8, %s21
        %p152 = scmp.lt.s32.totalorder %s20, 1
        %s153 = scalar_select %p152, %s20, 1
        %p154 = scmp.lt.s32.totalorder %s151, 7
        %s155 = scalar_select %p154, %s151, 7
        %s156 = smul.addr %s153, 8
        %s157 = sadd.s32 %s155, %s156
        %s158 = smul.addr %s157, 8
        %s159 = scalar_lea.vmem %s0, %s158
        %p160 = pneg %p51
        %p161 = pneg %p48
        %p162 = scmp.lt.s32.totalorder %s20, 1
        %s163 = scalar_select %p162, %s20, 1
        %s164 = smul.addr %s163, 4
        %s165 = scalar_lea.vmem %s1, %s164
        %p166 = pneg %p77
        %p167 = pneg %p74
        %p168 = pneg %p105
        %p169 = pneg %p102
        %s170 = sand.u32 %s92, 1
        %s171 = scalar_lea.sflag [#allocation3], %s170
        %s172 = sand.u32 %s92, 1
        %s173 = smul.addr %s172, 64
        %s174 = scalar_lea.vmem [#allocation2], %s173
        %s175 = smul.u32 8, %s21
        %p176 = scmp.lt.s32.totalorder %s20, 1
        %s177 = scalar_select %p176, %s20, 1
        %p178 = scmp.lt.s32.totalorder %s175, 7
        %s179 = scalar_select %p178, %s175, 7
        %s180 = smul.addr %s177, 8
        %s181 = sadd.s32 %s179, %s180
        %s182 = smul.addr %s181, 8
        %s183 = scalar_lea.vmem %s0, %s182
        %s184 = smul.u32 8, %s21
        %p185 = scmp.lt.s32.totalorder %s20, 1
        %s186 = scalar_select %p185, %s20, 1
        %s187 = smul.addr %s186, 4
        %s188 = scalar_lea.vmem %s1, %s187
        %s189 = smul.u32 8, %s21
        %v190 = vld [vmem:[%s183] sm:$0xff]
        %v191 = vld [vmem:[%s183 + $0x8] sm:$0xff]
        %v192 = vld [vmem:[%s183 + $0x10] sm:$0xff]
        %v193 = vld [vmem:[%s183 + $0x18] sm:$0xff]
        %v194 = vld [vmem:[%s183 + $0x20] sm:$0xff]
        %v195 = vld [vmem:[%s183 + $0x28] sm:$0xff]
        %v196 = vld [vmem:[%s183 + $0x30] sm:$0xff]
        %v197 = vld [vmem:[%s183 + $0x38] sm:$0xff]
        %v198 = vld [vmem:[%s188] sm:$0x7]
        %200 = vset.pattern.permute.xlu0 0
        %201 = vperm.xlu0 %200, %v190
        %v202 = vpop.permute.xlu0 %201
        %205 = vset.pattern.permute.xlu0 0
        %206 = vperm.xlu0 %205, %v191
        %v207 = vpop.permute.xlu0 %206
        %210 = vset.pattern.permute.xlu0 0
        %211 = vperm.xlu0 %210, %v192
        %v212 = vpop.permute.xlu0 %211
        %215 = vset.pattern.permute.xlu0 0
        %216 = vperm.xlu0 %215, %v193
        %v217 = vpop.permute.xlu0 %216
        %220 = vset.pattern.permute.xlu0 0
        %221 = vperm.xlu0 %220, %v194
        %v222 = vpop.permute.xlu0 %221
        %225 = vset.pattern.permute.xlu0 0
        %226 = vperm.xlu0 %225, %v195
        %v227 = vpop.permute.xlu0 %226
        %230 = vset.pattern.permute.xlu0 0
        %231 = vperm.xlu0 %230, %v196
        %v232 = vpop.permute.xlu0 %231
        %235 = vset.pattern.permute.xlu0 0
        %236 = vperm.xlu0 %235, %v197
        %v237 = vpop.permute.xlu0 %236
        %v239 = vlaneseq
        %v240 = vshrl.u32 %v239, 7
        %v241 = vsub.s32 0, %v240
        %v242 = vrot.slane %v198, %v241
        %v243 = vsub.f32 %v202, %v242
        %v244 = vsub.f32 %v207, %v242
        %v245 = vsub.f32 %v212, %v242
        %v246 = vsub.f32 %v217, %v242
        %v247 = vsub.f32 %v222, %v242
        %v248 = vsub.f32 %v227, %v242
        %v249 = vsub.f32 %v232, %v242
        %v250 = vsub.f32 %v237, %v242
        %251 = vset.pattern.permute.xlu0 1
        %252 = vperm.xlu0 %251, %v190
        %v253 = vpop.permute.xlu0 %252
        %255 = vset.pattern.permute.xlu0 1
        %256 = vperm.xlu0 %255, %v191
        %v257 = vpop.permute.xlu0 %256
        %259 = vset.pattern.permute.xlu0 1
        %260 = vperm.xlu0 %259, %v192
        %v261 = vpop.permute.xlu0 %260
        %263 = vset.pattern.permute.xlu0 1
        %264 = vperm.xlu0 %263, %v193
        %v265 = vpop.permute.xlu0 %264
        %267 = vset.pattern.permute.xlu0 1
        %268 = vperm.xlu0 %267, %v194
        %v269 = vpop.permute.xlu0 %268
        %271 = vset.pattern.permute.xlu0 1
        %272 = vperm.xlu0 %271, %v195
        %v273 = vpop.permute.xlu0 %272
        %275 = vset.pattern.permute.xlu0 1
        %276 = vperm.xlu0 %275, %v196
        %v277 = vpop.permute.xlu0 %276
        %279 = vset.pattern.permute.xlu0 1
        %280 = vperm.xlu0 %279, %v197
        %v281 = vpop.permute.xlu0 %280
        %v283 = vlaneseq
        %v284 = vshrl.u32 %v283, 7
        %v285 = vsub.s32 1, %v284
        %v286 = vrot.slane %v198, %v285
        %v287 = vsub.f32 %v253, %v286
        %v288 = vsub.f32 %v257, %v286
        %v289 = vsub.f32 %v261, %v286
        %v290 = vsub.f32 %v265, %v286
        %v291 = vsub.f32 %v269, %v286
        %v292 = vsub.f32 %v273, %v286
        %v293 = vsub.f32 %v277, %v286
        %v294 = vsub.f32 %v281, %v286
        %295 = vset.pattern.permute.xlu0 2
        %296 = vperm.xlu0 %295, %v190
        %v297 = vpop.permute.xlu0 %296
        %299 = vset.pattern.permute.xlu0 2
        %300 = vperm.xlu0 %299, %v191
        %v301 = vpop.permute.xlu0 %300
        %303 = vset.pattern.permute.xlu0 2
        %304 = vperm.xlu0 %303, %v192
        %v305 = vpop.permute.xlu0 %304
        %307 = vset.pattern.permute.xlu0 2
        %308 = vperm.xlu0 %307, %v193
        %v309 = vpop.permute.xlu0 %308
        %311 = vset.pattern.permute.xlu0 2
        %312 = vperm.xlu0 %311, %v194
        %v313 = vpop.permute.xlu0 %312
        %315 = vset.pattern.permute.xlu0 2
        %316 = vperm.xlu0 %315, %v195
        %v317 = vpop.permute.xlu0 %316
        %319 = vset.pattern.permute.xlu0 2
        %320 = vperm.xlu0 %319, %v196
        %v321 = vpop.permute.xlu0 %320
        %323 = vset.pattern.permute.xlu0 2
        %324 = vperm.xlu0 %323, %v197
        %v325 = vpop.permute.xlu0 %324
        %v327 = vlaneseq
        %v328 = vshrl.u32 %v327, 7
        %v329 = vsub.s32 2, %v328
        %v330 = vrot.slane %v198, %v329
        %v331 = vsub.f32 %v297, %v330
        %v332 = vsub.f32 %v301, %v330
        %v333 = vsub.f32 %v305, %v330
        %v334 = vsub.f32 %v309, %v330
        %v335 = vsub.f32 %v313, %v330
        %v336 = vsub.f32 %v317, %v330
        %v337 = vsub.f32 %v321, %v330
        %v338 = vsub.f32 %v325, %v330
        %v339 = vmul.f32 %v243, %v243
        %v340 = vmul.f32 %v244, %v244
        %v341 = vmul.f32 %v245, %v245
        %v342 = vmul.f32 %v246, %v246
        %v343 = vmul.f32 %v247, %v247
        %v344 = vmul.f32 %v248, %v248
        %v345 = vmul.f32 %v249, %v249
        %v346 = vmul.f32 %v250, %v250
        %v347 = vmul.f32 %v287, %v287
        %v348 = vmul.f32 %v288, %v288
        %v349 = vmul.f32 %v289, %v289
        %v350 = vmul.f32 %v290, %v290
        %v351 = vmul.f32 %v291, %v291
        %v352 = vmul.f32 %v292, %v292
        %v353 = vmul.f32 %v293, %v293
        %v354 = vmul.f32 %v294, %v294
        %v355 = vadd.f32 %v339, %v347
        %v356 = vadd.f32 %v340, %v348
        %v357 = vadd.f32 %v341, %v349
        %v358 = vadd.f32 %v342, %v350
        %v359 = vadd.f32 %v343, %v351
        %v360 = vadd.f32 %v344, %v352
        %v361 = vadd.f32 %v345, %v353
        %v362 = vadd.f32 %v346, %v354
        %v363 = vmul.f32 %v331, %v331
        %v364 = vmul.f32 %v332, %v332
        %v365 = vmul.f32 %v333, %v333
        %v366 = vmul.f32 %v334, %v334
        %v367 = vmul.f32 %v335, %v335
        %v368 = vmul.f32 %v336, %v336
        %v369 = vmul.f32 %v337, %v337
        %v370 = vmul.f32 %v338, %v338
        %v371 = vadd.f32 %v355, %v363
        %v372 = vadd.f32 %v356, %v364
        %v373 = vadd.f32 %v357, %v365
        %v374 = vadd.f32 %v358, %v366
        %v375 = vadd.f32 %v359, %v367
        %v376 = vadd.f32 %v360, %v368
        %v377 = vadd.f32 %v361, %v369
        %v378 = vadd.f32 %v362, %v370
        %379 = vst [vmem:[%s174] sm:$0xff] %v371
        %380 = vst [vmem:[%s174 + $0x8] sm:$0xff] %v372
        %381 = vst [vmem:[%s174 + $0x10] sm:$0xff] %v373
        %382 = vst [vmem:[%s174 + $0x18] sm:$0xff] %v374
        %383 = vst [vmem:[%s174 + $0x20] sm:$0xff] %v375
        %384 = vst [vmem:[%s174 + $0x28] sm:$0xff] %v376
        %385 = vst [vmem:[%s174 + $0x30] sm:$0xff] %v377
        %386 = vst [vmem:[%s174 + $0x38] sm:$0xff] %v378
        %s387 = sand.u32 %s92, 1
        %s388 = scalar_lea.sflag [#allocation3], %s387
        %s389 = sand.u32 %s92, 1
        %s390 = smul.addr %s389, 64
        %s391 = scalar_lea.vmem [#allocation2], %s390
        // Predicated region
        $region29: #{tpu_custom_call.1} parent=27 // pred_check
          %p392 = pneg %p102
        $region30: #{tpu_custom_call.1} parent=27 // pred_check_branch
          %394 = sbr.rel (%p392) target = $region32
        $region31: #{tpu_custom_call.1} parent=27 // pred_region
          %s395 = smul.u32 8, %s21
          %s397 = ssub.s32 1024, 1024
          %398 = vsyncadd %s388, %s397
          %s399 = smul.addr %s20, 8
          %s400 = sadd.s32 %s395, %s399
          %s401 = smul.addr %s400, 128
          %s402 = scalar_lea.hbm %s2, %s401
          %s403 = sshll.u32 %s391, 4
          %s404 = int_to_ptr.vmem [resolvable:$true] %s403
          %409 = dma.vmem_to_hbm [thread:$0]  %s404, 1024, %s402, %s388, 128, 128, 8
        $region32: #{tpu_custom_call.1} parent=27 // pred_fallthru
          _
      $region28: #{tpu_custom_call.1} parent=5 // pred_fallthru
        _
      %p410 = scmp.le.s32.totalorder 2, %s11
      // Predicated region
      $region33: #{tpu_custom_call.1} parent=5 // pred_check
        %p411 = pneg %p410
      $region34: #{tpu_custom_call.1} parent=5 // pred_check_branch
        %413 = sbr.rel (%p411) target = $region36
      $region35: #{tpu_custom_call.1} parent=5 // pred_region
        %s414 = ssub.s32 %s11, 2
        // Predicated region
        $region37: #{tpu_custom_call.1} parent=35 // pred_check
          %p415 = pneg %p108
        $region38: #{tpu_custom_call.1} parent=35 // pred_check_branch
          %417 = sbr.rel (%p415) target = $region40
        $region39: #{tpu_custom_call.1} parent=35 // pred_region
          %s418 = sand.u32 %s93, 1
          %s419 = scalar_lea.sflag [#allocation3], %s418
          %s420 = sand.u32 %s93, 1
          %s421 = smul.addr %s420, 64
          %s422 = scalar_lea.vmem [#allocation2], %s421
          %423 = dma.done %s419, 1024
        $region40: #{tpu_custom_call.1} parent=35 // pred_fallthru
          _
      $region36: #{tpu_custom_call.1} parent=5 // pred_fallthru
        _
    $region6: #{tpu_custom_call.1} parent=1 // loop_footer
      %s15 = sadd.s32 1, %s11
    $region7: #{tpu_custom_call.1} parent=1 // loop_footer_branch
      %10 = sbr.rel target = $region3
    $region8: #{tpu_custom_call.1} parent=1 // loop_exit
      _
    %424 = vsyncpa [#allocation3], 1
    %s425 = scalar_lea.sflag [#allocation3], 1
    %426 = vsyncpa %s425, 1

</llo_original>
